<compile_context>
chip_gen: v5e
topology: v5e:2x2
jax: 0.10.0
libtpu: 0.0.40
codegen_flags: <defaults>
</compile_context>

<pallas_src>
import jax
import jax.numpy as jnp
from jax.experimental import pallas as pl
from jax.experimental.pallas import tpu as pltpu


def _round_up(v, m):
    return ((v + m - 1) // m) * m


# ---------------------------------------------------------------------------
# Pass 1: per node-tile, y = x @ theta + bias, then accumulate H^T @ y and the
# edge degrees across all node tiles; finalize y_e = De @ (H^T @ y).
# ---------------------------------------------------------------------------
def hyconv_edge_agg_kernel(x_ref, ht_ref, theta_ref, bias_ref,
                           ye_ref, acc_ref, deg_ref):
    step = pl.program_id(0)

    @pl.when(step == 0)
    def _():
        acc_ref[...] = jnp.zeros_like(acc_ref)
        deg_ref[...] = jnp.zeros_like(deg_ref)

    x = x_ref[...]                                   # (TN, C)  f32
    ht = ht_ref[...].astype(jnp.float32)             # (E, TN)  bf16 in HBM -> f32

    # y = x @ theta + bias   (MXU, f32 accumulation; bias add stays f32 -> v5e safe)
    y = jnp.dot(x, theta_ref[...],
                preferred_element_type=jnp.float32) + bias_ref[...]   # (TN, O)

    # Edge aggregation with a pre-transposed H tile: canonical (E,TN)x(TN,O)
    # contraction, no in-kernel transpose of the large operand.
    acc_ref[...] += jnp.dot(ht, y, preferred_element_type=jnp.float32)
    # Edge degrees (column sums of H) accumulated across node tiles (XLU reduce).
    deg_ref[...] += jnp.sum(ht, axis=1, keepdims=True)                # (E, 1)

    @pl.when(step == pl.num_programs(0) - 1)
    def _():
        deg = deg_ref[...]
        # Guarded exact reciprocal: padded (zero-degree) hyperedges contribute 0.
        # (Reference would give inf for truly empty hyperedges; the guard also
        #  keeps padding from polluting real outputs. approx=True reciprocal
        #  would not meet the 1e-5 check.)
        de_inv = jnp.where(deg > 0.0, 1.0 / deg, 0.0)
        ye_ref[...] = (acc_ref[...] * de_inv).astype(ye_ref.dtype)


# ---------------------------------------------------------------------------
# Pass 2: per node-tile, y_v = Dv @ (H @ y_e). Row sums of the local H tile are
# the full node degrees (all E columns present), so this pass is embarrassingly
# parallel over node tiles.
# ---------------------------------------------------------------------------
def hyconv_node_agg_kernel(h_ref, ye_ref, out_ref):
    h = h_ref[...].astype(jnp.float32)               # (TN, E)
    deg = jnp.sum(h, axis=1, keepdims=True)          # (TN, 1) node degrees
    dv_inv = jnp.where(deg > 0.0, 1.0 / deg, 0.0)
    yv = jnp.dot(h, ye_ref[...], preferred_element_type=jnp.float32)  # (TN, O)
    out_ref[...] = (dv_inv * yv).astype(out_ref.dtype)


def hyconv(x, H, theta, bias, *, node_tile=256):
    """Fused HyConv forward. x:(N,C), H:(N,E), theta:(C,O), bias:(O,) -> (N,O)."""
    N, C = x.shape
    _, E = H.shape
    O = theta.shape[1]

    # Tile/padding choices: lane dims (E, O) -> multiples of 128 (lane-dense
    # stores, clean vreg layout); node tile -> 256 for large N (MXU-aligned on
    # v6e/v7x, 128-aligned for v5e), full (8-rounded) extent for small N.
    TN = node_tile if N > node_tile else _round_up(N, 8)
    N_pad = _round_up(N, TN)
    C_pad = _round_up(C, 8)
    E_pad = _round_up(E, 128)
    O_pad = _round_up(O, 128)

    f32 = jnp.float32
    x_p = jnp.pad(x.astype(f32), ((0, N_pad - N), (0, C_pad - C)))
    th_p = jnp.pad(theta.astype(f32), ((0, C_pad - C), (0, O_pad - O)))
    b_p = jnp.pad(bias.astype(f32).reshape(1, O), ((0, 0), (0, O_pad - O)))
    # H is binary -> exact in bf16; halves HBM traffic of the dominant operand.
    h_b = jnp.pad(H.astype(jnp.bfloat16), ((0, N_pad - N), (0, E_pad - E)))
    # Pre-transposed (E, N)-major copy for pass 1 (layout plumbing in the wrapper).
    ht_b = h_b.T

    grid = (N_pad // TN,)
    # Explicit VMEM budget: comfortably under v7x's 64 MiB physical VMEM,
    # trivially fine on v5e/v6e (128 MiB).
    vmem_limit = 48 * 1024 * 1024

    # ---- pass 1: edge aggregation (reduction over node tiles) ----
    y_e = pl.pallas_call(
        hyconv_edge_agg_kernel,
        out_shape=jax.ShapeDtypeStruct((E_pad, O_pad), f32),
        grid_spec=pltpu.PrefetchScalarGridSpec(
            num_scalar_prefetch=0,
            grid=grid,
            in_specs=[
                pl.BlockSpec((TN, C_pad), lambda i: (i, 0)),       # x tile
                pl.BlockSpec((E_pad, TN), lambda i: (0, i)),       # H^T tile
                pl.BlockSpec((C_pad, O_pad), lambda i: (0, 0)),    # theta (resident)
                pl.BlockSpec((1, O_pad), lambda i: (0, 0)),        # bias  (resident)
            ],
            out_specs=pl.BlockSpec((E_pad, O_pad), lambda i: (0, 0)),
            scratch_shapes=[
                pltpu.VMEM((E_pad, O_pad), f32),   # y_e accumulator
                pltpu.VMEM((E_pad, 1), f32),       # edge-degree accumulator
            ],
        ),
        compiler_params=pltpu.CompilerParams(
            dimension_semantics=("arbitrary",),     # reduction axis
            vmem_limit_bytes=vmem_limit),
    )(x_p, ht_b, th_p, b_p)

    # ---- pass 2: node aggregation (parallel over node tiles) ----
    out_p = pl.pallas_call(
        hyconv_node_agg_kernel,
        out_shape=jax.ShapeDtypeStruct((N_pad, O_pad), f32),
        grid_spec=pltpu.PrefetchScalarGridSpec(
            num_scalar_prefetch=0,
            grid=grid,
            in_specs=[
                pl.BlockSpec((TN, E_pad), lambda i: (i, 0)),       # H tile
                pl.BlockSpec((E_pad, O_pad), lambda i: (0, 0)),    # y_e (resident)
            ],
            out_specs=pl.BlockSpec((TN, O_pad), lambda i: (i, 0)),
        ),
        compiler_params=pltpu.CompilerParams(
            dimension_semantics=("parallel",),      # v7x: split node tiles over 2 TCs
            vmem_limit_bytes=vmem_limit),
    )(h_b, y_e)

    return out_p[:N, :O].astype(x.dtype)


def hyconv_reference(x, H, theta, bias):
    """Pure-JAX reference, line-for-line with the PyTorch forward."""
    y = jnp.einsum('nc,co->no', x, theta) + bias[None, :]
    dv_inv = 1.0 / H.sum(axis=1)
    de_inv = 1.0 / H.sum(axis=0)
    HDv = dv_inv[:, None] * H
    HDe = H * de_inv[None, :]
    y = jnp.einsum('vc,ve->ec', y, HDe)
    y = jnp.einsum('ec,ve->vc', y, HDv)
    return y


if __name__ == "__main__":
    key = jax.random.PRNGKey(0)
    k_x, k_h, k_theta = jax.random.split(key, 3)

    # Small shapes consistent with the module: N nodes, C in_ch, E hyperedges, O out_ch.
    N, C, E, O = 16, 8, 8, 32

    # Node features.
    x = jax.random.normal(k_x, (N, C), dtype=jnp.float32)

    # Binary incidence matrix with no empty rows/columns (avoid div-by-zero).
    H = (jax.random.uniform(k_h, (N, E)) < 0.4).astype(jnp.float32)
    rows = jnp.arange(N)
    H = H.at[rows, rows % E].set(1.0)

    # Deterministic parameter init matching reset_parameters():
    #   theta: xavier_uniform_, bias: zeros_.
    bound = (6.0 / (C + O)) ** 0.5
    theta = jax.random.uniform(k_theta, (C, O), dtype=jnp.float32,
                               minval=-bound, maxval=bound)
    bias = jnp.zeros((O,), dtype=jnp.float32)

    out = hyconv(x, H, theta, bias)
    out = jax.block_until_ready(out)

    ref = hyconv_reference(x, H, theta, bias)
    assert out.shape == (N, O)
    assert jnp.allclose(out, ref, atol=1e-5, rtol=1e-5), "mismatch vs reference"

    print("KERNEL_OK")
</pallas_src>

<mosaic_0001>
module attributes {stable_mosaic.version = 11 : i64} {
  func.func @hyconv_edge_agg_kernel(%arg0: i32, %arg1: memref<16x8xf32, #tpu.memory_space<vmem>>, %arg2: memref<128x16xbf16, #tpu.memory_space<vmem>>, %arg3: memref<8x128xf32, #tpu.memory_space<vmem>>, %arg4: memref<1x128xf32, #tpu.memory_space<vmem>>, %arg5: memref<128x128xf32, #tpu.memory_space<vmem>>, %arg6: memref<128x128xf32, #tpu.memory_space<vmem>>, %arg7: memref<128x1xf32, #tpu.memory_space<vmem>>) attributes {dimension_semantics = [#tpu.dimension_semantics<arbitrary>], iteration_bounds = array<i64: 1>, scalar_prefetch = 0 : i64, scratch_operands = 2 : i64, tpu.core_type = #tpu.core_type<tc>, window_params = [{transform_indices = @transform_0, window_bounds = array<i64: 16, 8>}, {transform_indices = @transform_1, window_bounds = array<i64: 128, 16>}, {pipeline_mode = #tpu.pipeline_mode<synchronous>, transform_indices = @transform_2, window_bounds = array<i64: 8, 128>}, {pipeline_mode = #tpu.pipeline_mode<synchronous>, transform_indices = @transform_3, window_bounds = array<i64: 1, 128>}, {pipeline_mode = #tpu.pipeline_mode<synchronous>, transform_indices = @transform_4, window_bounds = array<i64: 128, 128>}]} {
    %c0_i32 = arith.constant 0 : i32
    %0 = arith.cmpi eq, %arg0, %c0_i32 : i32
    %1 = arith.extui %0 : i1 to i32
    %c0_i32_0 = arith.constant 0 : i32
    %2 = arith.cmpi ne, %1, %c0_i32_0 : i32
    scf.if %2 {
      %cst_20 = arith.constant 0.000000e+00 : f32
      %23 = vector.broadcast %cst_20 : f32 to vector<128x128xf32>
      %c0_21 = arith.constant 0 : index
      %c0_22 = arith.constant 0 : index
      %24 = vector.load %arg6[%c0_21, %c0_22] : memref<128x128xf32, #tpu.memory_space<vmem>>, vector<128x128xf32>
      tpu.vector_store %arg6[%c0_21, %c0_22], %23 {strides = array<i32>} : memref<128x128xf32, #tpu.memory_space<vmem>>, vector<128x128xf32>,
      %cst_23 = arith.constant 0.000000e+00 : f32
      %25 = vector.broadcast %cst_23 : f32 to vector<128x1xf32>
      %c0_24 = arith.constant 0 : index
      %c0_25 = arith.constant 0 : index
      %26 = vector.load %arg7[%c0_24, %c0_25] : memref<128x1xf32, #tpu.memory_space<vmem>>, vector<128x1xf32>
      tpu.vector_store %arg7[%c0_24, %c0_25], %25 {strides = array<i32>} : memref<128x1xf32, #tpu.memory_space<vmem>>, vector<128x1xf32>,
    } else {
    }
    %c0 = arith.constant 0 : index
    %c0_1 = arith.constant 0 : index
    %3 = vector.load %arg1[%c0, %c0_1] : memref<16x8xf32, #tpu.memory_space<vmem>>, vector<16x8xf32>
    %c0_2 = arith.constant 0 : index
    %c0_3 = arith.constant 0 : index
    %4 = vector.load %arg2[%c0_2, %c0_3] : memref<128x16xbf16, #tpu.memory_space<vmem>>, vector<128x16xbf16>
    %5 = arith.extf %4 : vector<128x16xbf16> to vector<128x16xf32>
    %c0_4 = arith.constant 0 : index
    %c0_5 = arith.constant 0 : index
    %6 = vector.load %arg3[%c0_4, %c0_5] : memref<8x128xf32, #tpu.memory_space<vmem>>, vector<8x128xf32>
    %cst = arith.constant dense<0.000000e+00> : vector<16x128xf32>
    %7 = tpu.matmul %3, %6, %cst {dimension_numbers = #tpu.dot_dimension_numbers<[1], [0], [0], [1], [0, 0, 1, 1], [], []>} : vector<16x8xf32>, vector<8x128xf32>, vector<16x128xf32> -> vector<16x128xf32>
    %c0_6 = arith.constant 0 : index
    %c0_7 = arith.constant 0 : index
    %8 = vector.load %arg4[%c0_6, %c0_7] : memref<1x128xf32, #tpu.memory_space<vmem>>, vector<1x128xf32>
    %9 = vector.broadcast %8 : vector<1x128xf32> to vector<16x128xf32>
    %10 = arith.addf %7, %9 : vector<16x128xf32>
    %c0_8 = arith.constant 0 : index
    %c0_9 = arith.constant 0 : index
    %11 = vector.load %arg6[%c0_8, %c0_9] : memref<128x128xf32, #tpu.memory_space<vmem>>, vector<128x128xf32>
    %cst_10 = arith.constant dense<0.000000e+00> : vector<128x128xf32>
    %12 = tpu.matmul %5, %10, %cst_10 {dimension_numbers = #tpu.dot_dimension_numbers<[1], [0], [0], [1], [0, 0, 1, 1], [], []>} : vector<128x16xf32>, vector<16x128xf32>, vector<128x128xf32> -> vector<128x128xf32>
    %13 = arith.addf %11, %12 : vector<128x128xf32>
    %c0_11 = arith.constant 0 : index
    %c0_12 = arith.constant 0 : index
    %14 = vector.load %arg6[%c0_11, %c0_12] : memref<128x128xf32, #tpu.memory_space<vmem>>, vector<128x128xf32>
    tpu.vector_store %arg6[%c0_11, %c0_12], %13 {strides = array<i32>} : memref<128x128xf32, #tpu.memory_space<vmem>>, vector<128x128xf32>,
    %c0_13 = arith.constant 0 : index
    %c0_14 = arith.constant 0 : index
    %15 = vector.load %arg7[%c0_13, %c0_14] : memref<128x1xf32, #tpu.memory_space<vmem>>, vector<128x1xf32>
    %cst_15 = arith.constant dense<0.000000e+00> : vector<128xf32>
    %16 = vector.multi_reduction <add>, %5, %cst_15 [1] : vector<128x16xf32> to vector<128xf32>
    %17 = vector.shape_cast %16 : vector<128xf32> to vector<128x1xf32>
    %18 = arith.addf %15, %17 : vector<128x1xf32>
    %c0_16 = arith.constant 0 : index
    %c0_17 = arith.constant 0 : index
    %19 = vector.load %arg7[%c0_16, %c0_17] : memref<128x1xf32, #tpu.memory_space<vmem>>, vector<128x1xf32>
    tpu.vector_store %arg7[%c0_16, %c0_17], %18 {strides = array<i32>} : memref<128x1xf32, #tpu.memory_space<vmem>>, vector<128x1xf32>,
    %c0_i32_18 = arith.constant 0 : i32
    %20 = arith.cmpi eq, %arg0, %c0_i32_18 : i32
    %21 = arith.extui %20 : i1 to i32
    %c0_i32_19 = arith.constant 0 : i32
    %22 = arith.cmpi ne, %21, %c0_i32_19 : i32
    scf.if %22 {
      %c0_20 = arith.constant 0 : index
      %c0_21 = arith.constant 0 : index
      %23 = vector.load %arg7[%c0_20, %c0_21] : memref<128x1xf32, #tpu.memory_space<vmem>>, vector<128x1xf32>
      %cst_22 = arith.constant 0.000000e+00 : f32
      %24 = vector.broadcast %cst_22 : f32 to vector<128x1xf32>
      %25 = arith.cmpf ogt, %23, %24 : vector<128x1xf32>
      %cst_23 = arith.constant 1.000000e+00 : f32
      %26 = vector.broadcast %cst_23 : f32 to vector<128x1xf32>
      %27 = arith.divf %26, %23 : vector<128x1xf32>
      %cst_24 = arith.constant 0.000000e+00 : f32
      %28 = vector.broadcast %cst_24 : f32 to vector<128x1xf32>
      %29 = arith.select %25, %27, %28 : vector<128x1xi1>, vector<128x1xf32>
      %c0_25 = arith.constant 0 : index
      %c0_26 = arith.constant 0 : index
      %30 = vector.load %arg6[%c0_25, %c0_26] : memref<128x128xf32, #tpu.memory_space<vmem>>, vector<128x128xf32>
      %31 = vector.broadcast %29 : vector<128x1xf32> to vector<128x128xf32>
      %32 = arith.mulf %30, %31 : vector<128x128xf32>
      %c0_27 = arith.constant 0 : index
      %c0_28 = arith.constant 0 : index
      %33 = vector.load %arg5[%c0_27, %c0_28] : memref<128x128xf32, #tpu.memory_space<vmem>>, vector<128x128xf32>
      tpu.vector_store %arg5[%c0_27, %c0_28], %32 {strides = array<i32>} : memref<128x128xf32, #tpu.memory_space<vmem>>, vector<128x128xf32>,
    } else {
    }
    return
  }
  func.func @transform_0(%arg0: i32) -> (i32, i32) {
    %c0_i32 = arith.constant 0 : i32
    %c0_i32_0 = arith.constant 0 : i32
    return %arg0, %c0_i32 : i32, i32
  }
  func.func @transform_1(%arg0: i32) -> (i32, i32) {
    %c0_i32 = arith.constant 0 : i32
    %c0_i32_0 = arith.constant 0 : i32
    return %c0_i32, %arg0 : i32, i32
  }
  func.func @transform_2(%arg0: i32) -> (i32, i32) {
    %c0_i32 = arith.constant 0 : i32
    %c0_i32_0 = arith.constant 0 : i32
    %c0_i32_1 = arith.constant 0 : i32
    return %c0_i32, %c0_i32_0 : i32, i32
  }
  func.func @transform_3(%arg0: i32) -> (i32, i32) {
    %c0_i32 = arith.constant 0 : i32
    %c0_i32_0 = arith.constant 0 : i32
    %c0_i32_1 = arith.constant 0 : i32
    return %c0_i32, %c0_i32_0 : i32, i32
  }
  func.func @transform_4(%arg0: i32) -> (i32, i32) {
    %c0_i32 = arith.constant 0 : i32
    %c0_i32_0 = arith.constant 0 : i32
    %c0_i32_1 = arith.constant 0 : i32
    return %c0_i32, %c0_i32_0 : i32, i32
  }
}

</mosaic_0001>

<llo_original>
// kernel: tpu_custom_call.1
$region0: #{tpu_custom_call.1}
  #allocation0 [shape = 'u32[]', space=smem, size = 0x4, offset = 0x4, fixed_abs, tag = 'smem constant byte address 0x4 - core index']
  #allocation1 [shape = 'u32[72,128]{1,0:T(1,128)}', space=vmem, size = 0x9000, scoped, tag = 'internal scratch']
  #allocation2 [shape = 'f32[128,128]{1,0:T(8,128)}', space=vmem, size = 0x10000, scoped, tag = 'scratch operand']
  #allocation3 [shape = 'f32[128,1]{1,0:T(8,128)}', space=vmem, size = 0x10000, scoped, tag = 'scratch operand']
  %s0 = inlined_call_operand.vmem [shape: f32[16,8], index: 0, kind: input, shape index: {}]
  %s1 = inlined_call_operand.vmem [shape: bf16[128,16], index: 1, kind: input, shape index: {}]
  %s2 = inlined_call_operand.vmem [shape: f32[8,128], index: 2, kind: input, shape index: {}]
  %s3 = inlined_call_operand.vmem [shape: f32[1,128], index: 3, kind: input, shape index: {}]
  %s4 = inlined_call_operand.hbm [shape: f32[128,128], index: 4, kind: output, shape index: {}]
  %s5 = sld [smem:[#allocation0]]
  $region34: #{tpu_custom_call.1} parent=0
    _
  %s7 = ssub.s32 1, %s5
  %s8 = scalar_select 0, %s7, %s5
  $region1: #{tpu_custom_call.1} parent=0
    #allocation4 [shape = 'u8[65536]{0}', space=vmem, size = 0x10000, scoped, tag = 'output window, operand 0, single buffered']
    #allocation5 [shape = 's32[1]{0}', space=sflag, size = 0x4, scoped, tag = 'scoped memory for tpu_custom_call.1']
    %9 = vsyncpa [#allocation5], 0
    // Predicated region
    $region2: #{tpu_custom_call.1} parent=1 // pred_check
      _
    $region3: #{tpu_custom_call.1} parent=1 // pred_check_branch
      %11 = sbr.rel (0) target = $region5
    $region4: #{tpu_custom_call.1} parent=1 // pred_region
      _
    $region5: #{tpu_custom_call.1} parent=1 // pred_fallthru
      _
    // Predicated region
    $region6: #{tpu_custom_call.1} parent=1 // pred_check
      _
    $region7: #{tpu_custom_call.1} parent=1 // pred_check_branch
      %13 = sbr.rel (0) target = $region9
    $region8: #{tpu_custom_call.1} parent=1 // pred_region
      _
    $region9: #{tpu_custom_call.1} parent=1 // pred_fallthru
      _
    // Predicated region
    $region10: #{tpu_custom_call.1} parent=1 // pred_check
      _
    $region11: #{tpu_custom_call.1} parent=1 // pred_check_branch
      %15 = sbr.rel (0) target = $region13
    $region12: #{tpu_custom_call.1} parent=1 // pred_region
      _
    $region13: #{tpu_custom_call.1} parent=1 // pred_fallthru
      _
    // Predicated region
    $region14: #{tpu_custom_call.1} parent=1 // pred_check
      _
    $region15: #{tpu_custom_call.1} parent=1 // pred_check_branch
      %17 = sbr.rel (0) target = $region17
    $region16: #{tpu_custom_call.1} parent=1 // pred_region
      _
    $region17: #{tpu_custom_call.1} parent=1 // pred_fallthru
      _
    %p18 = scmp.eq.s32.totalorder 0, 0
    // Predicated region
    $region18: #{tpu_custom_call.1} parent=1 // pred_check
      %p19 = pneg %p18
    $region19: #{tpu_custom_call.1} parent=1 // pred_check_branch
      %21 = sbr.rel (%p19) target = $region21
    $region20: #{tpu_custom_call.1} parent=1 // pred_region
      %22 = vst [vmem:[#allocation2] sm:$0xff] 0.0
      %23 = vst [vmem:[#allocation2 + $0x8] sm:$0xff] 0.0
      %24 = vst [vmem:[#allocation2 + $0x10] sm:$0xff] 0.0
      %25 = vst [vmem:[#allocation2 + $0x18] sm:$0xff] 0.0
      %26 = vst [vmem:[#allocation2 + $0x20] sm:$0xff] 0.0
      %27 = vst [vmem:[#allocation2 + $0x28] sm:$0xff] 0.0
      %28 = vst [vmem:[#allocation2 + $0x30] sm:$0xff] 0.0
      %29 = vst [vmem:[#allocation2 + $0x38] sm:$0xff] 0.0
      %30 = vst [vmem:[#allocation2 + $0x40] sm:$0xff] 0.0
      %31 = vst [vmem:[#allocation2 + $0x48] sm:$0xff] 0.0
      %32 = vst [vmem:[#allocation2 + $0x50] sm:$0xff] 0.0
      %33 = vst [vmem:[#allocation2 + $0x58] sm:$0xff] 0.0
      %34 = vst [vmem:[#allocation2 + $0x60] sm:$0xff] 0.0
      %35 = vst [vmem:[#allocation2 + $0x68] sm:$0xff] 0.0
      %36 = vst [vmem:[#allocation2 + $0x70] sm:$0xff] 0.0
      %37 = vst [vmem:[#allocation2 + $0x78] sm:$0xff] 0.0
      %vm38 = vcmask 7168
      %39 = vst.msk [vmem:[#allocation3] sm:$0xff] %vm38, 0.0
      %40 = vst.msk [vmem:[#allocation3 + $0x8] sm:$0xff] %vm38, 0.0
      %41 = vst.msk [vmem:[#allocation3 + $0x10] sm:$0xff] %vm38, 0.0
      %42 = vst.msk [vmem:[#allocation3 + $0x18] sm:$0xff] %vm38, 0.0
      %43 = vst.msk [vmem:[#allocation3 + $0x20] sm:$0xff] %vm38, 0.0
      %44 = vst.msk [vmem:[#allocation3 + $0x28] sm:$0xff] %vm38, 0.0
      %45 = vst.msk [vmem:[#allocation3 + $0x30] sm:$0xff] %vm38, 0.0
      %46 = vst.msk [vmem:[#allocation3 + $0x38] sm:$0xff] %vm38, 0.0
      %47 = vst.msk [vmem:[#allocation3 + $0x40] sm:$0xff] %vm38, 0.0
      %48 = vst.msk [vmem:[#allocation3 + $0x48] sm:$0xff] %vm38, 0.0
      %49 = vst.msk [vmem:[#allocation3 + $0x50] sm:$0xff] %vm38, 0.0
      %50 = vst.msk [vmem:[#allocation3 + $0x58] sm:$0xff] %vm38, 0.0
      %51 = vst.msk [vmem:[#allocation3 + $0x60] sm:$0xff] %vm38, 0.0
      %52 = vst.msk [vmem:[#allocation3 + $0x68] sm:$0xff] %vm38, 0.0
      %53 = vst.msk [vmem:[#allocation3 + $0x70] sm:$0xff] %vm38, 0.0
      %54 = vst.msk [vmem:[#allocation3 + $0x78] sm:$0xff] %vm38, 0.0
    $region21: #{tpu_custom_call.1} parent=1 // pred_fallthru
      _
    %v55 = vld [vmem:[%s0] sm:$0xff]
    %v56 = vld [vmem:[%s0 + $0x8] sm:$0xff]
    %v57 = vld [vmem:[%s1] sm:$0xf]
    %v58 = vld [vmem:[%s1 + $0x4] sm:$0xf]
    %v59 = vld [vmem:[%s1 + $0x8] sm:$0xf]
    %v60 = vld [vmem:[%s1 + $0xc] sm:$0xf]
    %v61 = vld [vmem:[%s1 + $0x10] sm:$0xf]
    %v62 = vld [vmem:[%s1 + $0x14] sm:$0xf]
    %v63 = vld [vmem:[%s1 + $0x18] sm:$0xf]
    %v64 = vld [vmem:[%s1 + $0x1c] sm:$0xf]
    %v65 = vld [vmem:[%s1 + $0x20] sm:$0xf]
    %v66 = vld [vmem:[%s1 + $0x24] sm:$0xf]
    %v67 = vld [vmem:[%s1 + $0x28] sm:$0xf]
    %v68 = vld [vmem:[%s1 + $0x2c] sm:$0xf]
    %v69 = vld [vmem:[%s1 + $0x30] sm:$0xf]
    %v70 = vld [vmem:[%s1 + $0x34] sm:$0xf]
    %v71 = vld [vmem:[%s1 + $0x38] sm:$0xf]
    %v72 = vld [vmem:[%s1 + $0x3c] sm:$0xf]
    %v73 = vunpack.c.l.bf16 %v57
    %v74 = vunpack.c.l.bf16 %v58
    %v75 = vunpack.c.l.bf16 %v59
    %v76 = vunpack.c.l.bf16 %v60
    %v77 = vunpack.c.l.bf16 %v61
    %v78 = vunpack.c.l.bf16 %v62
    %v79 = vunpack.c.l.bf16 %v63
    %v80 = vunpack.c.l.bf16 %v64
    %v81 = vunpack.c.l.bf16 %v65
    %v82 = vunpack.c.l.bf16 %v66
    %v83 = vunpack.c.l.bf16 %v67
    %v84 = vunpack.c.l.bf16 %v68
    %v85 = vunpack.c.l.bf16 %v69
    %v86 = vunpack.c.l.bf16 %v70
    %v87 = vunpack.c.l.bf16 %v71
    %v88 = vunpack.c.l.bf16 %v72
    %v89 = vld [vmem:[%s2] sm:$0xff]
    %v90 = vld [vmem:[%s3] sm:$0x1]
    %v92 = vperm.slane %v90, 0
    %vm94 = vcmask 64512
    %v96 = vsel %vm94, %v55, 0
    %v99 = vsel %vm94, %v56, 0
    %101 = vmatpush.msra.mxu0 0.0
    %102 = vmatpush.msra.mxu0 0.0
    %103 = vmatpush.msra.mxu0 0.0
    %104 = vmatpush.msra.mxu0 0.0
    %105 = vmatpush.msra.mxu0 0.0
    %106 = vmatpush.msra.mxu0 0.0
    %107 = vmatpush.msra.mxu0 0.0
    %108 = vmatpush.msra.mxu0 0.0
    %109 = vmatpush.msra.mxu0 0.0
    %110 = vmatpush.msra.mxu0 0.0
    %111 = vmatpush.msra.mxu0 0.0
    %112 = vmatpush.msra.mxu0 0.0
    %113 = vmatpush.msra.mxu0 0.0
    %114 = vmatpush.msra.mxu0 0.0
    %115 = vmatpush.msra.mxu0 0.0
    %116 = vmatpush.msra.mxu0 %v89
    %117 = vmatmul.f32.gmra.mxu0 %v96
    %v118 = vpop.f32.mrf.mxu0
    %v119 = vadd.f32 %v92, %v118
    %120 = vmatmul.f32.gmra.mxu0 %v99
    %v121 = vpop.f32.mrf.mxu0
    %v122 = vadd.f32 %v92, %v121
    %123 = vdwg.mxu0
    %v124 = vld [vmem:[#allocation2] sm:$0xff]
    %v125 = vld [vmem:[#allocation2 + $0x8] sm:$0xff]
    %v126 = vld [vmem:[#allocation2 + $0x10] sm:$0xff]
    %v127 = vld [vmem:[#allocation2 + $0x18] sm:$0xff]
    %v128 = vld [vmem:[#allocation2 + $0x20] sm:$0xff]
    %v129 = vld [vmem:[#allocation2 + $0x28] sm:$0xff]
    %v130 = vld [vmem:[#allocation2 + $0x30] sm:$0xff]
    %v131 = vld [vmem:[#allocation2 + $0x38] sm:$0xff]
    %v132 = vld [vmem:[#allocation2 + $0x40] sm:$0xff]
    %v133 = vld [vmem:[#allocation2 + $0x48] sm:$0xff]
    %v134 = vld [vmem:[#allocation2 + $0x50] sm:$0xff]
    %v135 = vld [vmem:[#allocation2 + $0x58] sm:$0xff]
    %v136 = vld [vmem:[#allocation2 + $0x60] sm:$0xff]
    %v137 = vld [vmem:[#allocation2 + $0x68] sm:$0xff]
    %v138 = vld [vmem:[#allocation2 + $0x70] sm:$0xff]
    %v139 = vld [vmem:[#allocation2 + $0x78] sm:$0xff]
    %vm140 = vcmask 130048
    %v142 = vsel %vm140, %v73, 0
    %v145 = vsel %vm140, %v74, 0
    %v148 = vsel %vm140, %v75, 0
    %v151 = vsel %vm140, %v76, 0
    %v154 = vsel %vm140, %v77, 0
    %v157 = vsel %vm140, %v78, 0
    %v160 = vsel %vm140, %v79, 0
    %v163 = vsel %vm140, %v80, 0
    %v166 = vsel %vm140, %v81, 0
    %v169 = vsel %vm140, %v82, 0
    %v172 = vsel %vm140, %v83, 0
    %v175 = vsel %vm140, %v84, 0
    %v178 = vsel %vm140, %v85, 0
    %v181 = vsel %vm140, %v86, 0
    %v184 = vsel %vm140, %v87, 0
    %v187 = vsel %vm140, %v88, 0
    %189 = vmatpush.msra.mxu0 0.0
    %190 = vmatpush.msra.mxu0 0.0
    %191 = vmatpush.msra.mxu0 0.0
    %192 = vmatpush.msra.mxu0 0.0
    %193 = vmatpush.msra.mxu0 0.0
    %194 = vmatpush.msra.mxu0 0.0
    %195 = vmatpush.msra.mxu0 0.0
    %196 = vmatpush.msra.mxu0 0.0
    %197 = vmatpush.msra.mxu0 0.0
    %198 = vmatpush.msra.mxu0 0.0
    %199 = vmatpush.msra.mxu0 0.0
    %200 = vmatpush.msra.mxu0 0.0
    %201 = vmatpush.msra.mxu0 0.0
    %202 = vmatpush.msra.mxu0 0.0
    %203 = vmatpush.msra.mxu0 %v122
    %204 = vmatpush.msra.mxu0 %v119
    %205 = vmatmul.f32.gmra.mxu0 %v142
    %v206 = vpop.f32.mrf.mxu0
    %v207 = vadd.f32 0.0, %v206
    %208 = vmatmul.f32.gmra.mxu0 %v145
    %v209 = vpop.f32.mrf.mxu0
    %v210 = vadd.f32 0.0, %v209
    %211 = vmatmul.f32.gmra.mxu0 %v148
    %v212 = vpop.f32.mrf.mxu0
    %v213 = vadd.f32 0.0, %v212
    %214 = vmatmul.f32.gmra.mxu0 %v151
    %v215 = vpop.f32.mrf.mxu0
    %v216 = vadd.f32 0.0, %v215
    %217 = vmatmul.f32.gmra.mxu0 %v154
    %v218 = vpop.f32.mrf.mxu0
    %v219 = vadd.f32 0.0, %v218
    %220 = vmatmul.f32.gmra.mxu0 %v157
    %v221 = vpop.f32.mrf.mxu0
    %v222 = vadd.f32 0.0, %v221
    %223 = vmatmul.f32.gmra.mxu0 %v160
    %v224 = vpop.f32.mrf.mxu0
    %v225 = vadd.f32 0.0, %v224
    %226 = vmatmul.f32.gmra.mxu0 %v163
    %v227 = vpop.f32.mrf.mxu0
    %v228 = vadd.f32 0.0, %v227
    %229 = vmatmul.f32.gmra.mxu0 %v166
    %v230 = vpop.f32.mrf.mxu0
    %v231 = vadd.f32 0.0, %v230
    %232 = vmatmul.f32.gmra.mxu0 %v169
    %v233 = vpop.f32.mrf.mxu0
    %v234 = vadd.f32 0.0, %v233
    %235 = vmatmul.f32.gmra.mxu0 %v172
    %v236 = vpop.f32.mrf.mxu0
    %v237 = vadd.f32 0.0, %v236
    %238 = vmatmul.f32.gmra.mxu0 %v175
    %v239 = vpop.f32.mrf.mxu0
    %v240 = vadd.f32 0.0, %v239
    %241 = vmatmul.f32.gmra.mxu0 %v178
    %v242 = vpop.f32.mrf.mxu0
    %v243 = vadd.f32 0.0, %v242
    %244 = vmatmul.f32.gmra.mxu0 %v181
    %v245 = vpop.f32.mrf.mxu0
    %v246 = vadd.f32 0.0, %v245
    %247 = vmatmul.f32.gmra.mxu0 %v184
    %v248 = vpop.f32.mrf.mxu0
    %v249 = vadd.f32 0.0, %v248
    %250 = vmatmul.f32.gmra.mxu0 %v187
    %v251 = vpop.f32.mrf.mxu0
    %v252 = vadd.f32 0.0, %v251
    %253 = vdwg.mxu0
    %v254 = vadd.f32 %v124, %v207
    %v255 = vadd.f32 %v125, %v210
    %v256 = vadd.f32 %v126, %v213
    %v257 = vadd.f32 %v127, %v216
    %v258 = vadd.f32 %v128, %v219
    %v259 = vadd.f32 %v129, %v222
    %v260 = vadd.f32 %v130, %v225
    %v261 = vadd.f32 %v131, %v228
    %v262 = vadd.f32 %v132, %v231
    %v263 = vadd.f32 %v133, %v234
    %v264 = vadd.f32 %v134, %v237
    %v265 = vadd.f32 %v135, %v240
    %v266 = vadd.f32 %v136, %v243
    %v267 = vadd.f32 %v137, %v246
    %v268 = vadd.f32 %v138, %v249
    %v269 = vadd.f32 %v139, %v252
    %270 = vst [vmem:[#allocation2] sm:$0xff] %v254
    %271 = vst [vmem:[#allocation2 + $0x8] sm:$0xff] %v255
    %272 = vst [vmem:[#allocation2 + $0x10] sm:$0xff] %v256
    %273 = vst [vmem:[#allocation2 + $0x18] sm:$0xff] %v257
    %274 = vst [vmem:[#allocation2 + $0x20] sm:$0xff] %v258
    %275 = vst [vmem:[#allocation2 + $0x28] sm:$0xff] %v259
    %276 = vst [vmem:[#allocation2 + $0x30] sm:$0xff] %v260
    %277 = vst [vmem:[#allocation2 + $0x38] sm:$0xff] %v261
    %278 = vst [vmem:[#allocation2 + $0x40] sm:$0xff] %v262
    %279 = vst [vmem:[#allocation2 + $0x48] sm:$0xff] %v263
    %280 = vst [vmem:[#allocation2 + $0x50] sm:$0xff] %v264
    %281 = vst [vmem:[#allocation2 + $0x58] sm:$0xff] %v265
    %282 = vst [vmem:[#allocation2 + $0x60] sm:$0xff] %v266
    %283 = vst [vmem:[#allocation2 + $0x68] sm:$0xff] %v267
    %284 = vst [vmem:[#allocation2 + $0x70] sm:$0xff] %v268
    %285 = vst [vmem:[#allocation2 + $0x78] sm:$0xff] %v269
    %v286 = vld [vmem:[#allocation3] sm:$0xff]
    %v287 = vld [vmem:[#allocation3 + $0x8] sm:$0xff]
    %v288 = vld [vmem:[#allocation3 + $0x10] sm:$0xff]
    %v289 = vld [vmem:[#allocation3 + $0x18] sm:$0xff]
    %v290 = vld [vmem:[#allocation3 + $0x20] sm:$0xff]
    %v291 = vld [vmem:[#allocation3 + $0x28] sm:$0xff]
    %v292 = vld [vmem:[#allocation3 + $0x30] sm:$0xff]
    %v293 = vld [vmem:[#allocation3 + $0x38] sm:$0xff]
    %v294 = vld [vmem:[#allocation3 + $0x40] sm:$0xff]
    %v295 = vld [vmem:[#allocation3 + $0x48] sm:$0xff]
    %v296 = vld [vmem:[#allocation3 + $0x50] sm:$0xff]
    %v297 = vld [vmem:[#allocation3 + $0x58] sm:$0xff]
    %v298 = vld [vmem:[#allocation3 + $0x60] sm:$0xff]
    %v299 = vld [vmem:[#allocation3 + $0x68] sm:$0xff]
    %v300 = vld [vmem:[#allocation3 + $0x70] sm:$0xff]
    %v301 = vld [vmem:[#allocation3 + $0x78] sm:$0xff]
    %v302 = vsel %vm140, %v73, 0.0
    %303 = vadd.xlane.f32.xlu0 %v302
    %v304 = vpop.xlane.xlu0 %303
    %v305 = vsel %vm140, %v74, 0.0
    %306 = vadd.xlane.f32.xlu0 %v305
    %v307 = vpop.xlane.xlu0 %306
    %v308 = vsel %vm140, %v75, 0.0
    %309 = vadd.xlane.f32.xlu0 %v308
    %v310 = vpop.xlane.xlu0 %309
    %v311 = vsel %vm140, %v76, 0.0
    %312 = vadd.xlane.f32.xlu0 %v311
    %v313 = vpop.xlane.xlu0 %312
    %v314 = vsel %vm140, %v77, 0.0
    %315 = vadd.xlane.f32.xlu0 %v314
    %v316 = vpop.xlane.xlu0 %315
    %v317 = vsel %vm140, %v78, 0.0
    %318 = vadd.xlane.f32.xlu0 %v317
    %v319 = vpop.xlane.xlu0 %318
    %v320 = vsel %vm140, %v79, 0.0
    %321 = vadd.xlane.f32.xlu0 %v320
    %v322 = vpop.xlane.xlu0 %321
    %v323 = vsel %vm140, %v80, 0.0
    %324 = vadd.xlane.f32.xlu0 %v323
    %v325 = vpop.xlane.xlu0 %324
    %v326 = vsel %vm140, %v81, 0.0
    %327 = vadd.xlane.f32.xlu0 %v326
    %v328 = vpop.xlane.xlu0 %327
    %v329 = vsel %vm140, %v82, 0.0
    %330 = vadd.xlane.f32.xlu0 %v329
    %v331 = vpop.xlane.xlu0 %330
    %v332 = vsel %vm140, %v83, 0.0
    %333 = vadd.xlane.f32.xlu0 %v332
    %v334 = vpop.xlane.xlu0 %333
    %v335 = vsel %vm140, %v84, 0.0
    %336 = vadd.xlane.f32.xlu0 %v335
    %v337 = vpop.xlane.xlu0 %336
    %v338 = vsel %vm140, %v85, 0.0
    %339 = vadd.xlane.f32.xlu0 %v338
    %v340 = vpop.xlane.xlu0 %339
    %v341 = vsel %vm140, %v86, 0.0
    %342 = vadd.xlane.f32.xlu0 %v341
    %v343 = vpop.xlane.xlu0 %342
    %v344 = vsel %vm140, %v87, 0.0
    %345 = vadd.xlane.f32.xlu0 %v344
    %v346 = vpop.xlane.xlu0 %345
    %v347 = vsel %vm140, %v88, 0.0
    %348 = vadd.xlane.f32.xlu0 %v347
    %v349 = vpop.xlane.xlu0 %348
    %v350 = vadd.f32 %v286, %v304
    %v351 = vadd.f32 %v287, %v307
    %v352 = vadd.f32 %v288, %v310
    %v353 = vadd.f32 %v289, %v313
    %v354 = vadd.f32 %v290, %v316
    %v355 = vadd.f32 %v291, %v319
    %v356 = vadd.f32 %v292, %v322
    %v357 = vadd.f32 %v293, %v325
    %v358 = vadd.f32 %v294, %v328
    %v359 = vadd.f32 %v295, %v331
    %v360 = vadd.f32 %v296, %v334
    %v361 = vadd.f32 %v297, %v337
    %v362 = vadd.f32 %v298, %v340
    %v363 = vadd.f32 %v299, %v343
    %v364 = vadd.f32 %v300, %v346
    %v365 = vadd.f32 %v301, %v349
    %vm366 = vcmask 7168
    %367 = vst.msk [vmem:[#allocation3] sm:$0xff] %vm366, %v350
    %368 = vst.msk [vmem:[#allocation3 + $0x8] sm:$0xff] %vm366, %v351
    %369 = vst.msk [vmem:[#allocation3 + $0x10] sm:$0xff] %vm366, %v352
    %370 = vst.msk [vmem:[#allocation3 + $0x18] sm:$0xff] %vm366, %v353
    %371 = vst.msk [vmem:[#allocation3 + $0x20] sm:$0xff] %vm366, %v354
    %372 = vst.msk [vmem:[#allocation3 + $0x28] sm:$0xff] %vm366, %v355
    %373 = vst.msk [vmem:[#allocation3 + $0x30] sm:$0xff] %vm366, %v356
    %374 = vst.msk [vmem:[#allocation3 + $0x38] sm:$0xff] %vm366, %v357
    %375 = vst.msk [vmem:[#allocation3 + $0x40] sm:$0xff] %vm366, %v358
    %376 = vst.msk [vmem:[#allocation3 + $0x48] sm:$0xff] %vm366, %v359
    %377 = vst.msk [vmem:[#allocation3 + $0x50] sm:$0xff] %vm366, %v360
    %378 = vst.msk [vmem:[#allocation3 + $0x58] sm:$0xff] %vm366, %v361
    %379 = vst.msk [vmem:[#allocation3 + $0x60] sm:$0xff] %vm366, %v362
    %380 = vst.msk [vmem:[#allocation3 + $0x68] sm:$0xff] %vm366, %v363
    %381 = vst.msk [vmem:[#allocation3 + $0x70] sm:$0xff] %vm366, %v364
    %382 = vst.msk [vmem:[#allocation3 + $0x78] sm:$0xff] %vm366, %v365
    // Predicated region
    $region22: #{tpu_custom_call.1} parent=1 // pred_check
      %p383 = pneg %p18
    $region23: #{tpu_custom_call.1} parent=1 // pred_check_branch
      %385 = sbr.rel (%p383) target = $region25
    $region24: #{tpu_custom_call.1} parent=1 // pred_region
      %v386 = vld [vmem:[#allocation3] sm:$0xff]
      %v387 = vld [vmem:[#allocation3 + $0x8] sm:$0xff]
      %v388 = vld [vmem:[#allocation3 + $0x10] sm:$0xff]
      %v389 = vld [vmem:[#allocation3 + $0x18] sm:$0xff]
      %v390 = vld [vmem:[#allocation3 + $0x20] sm:$0xff]
      %v391 = vld [vmem:[#allocation3 + $0x28] sm:$0xff]
      %v392 = vld [vmem:[#allocation3 + $0x30] sm:$0xff]
      %v393 = vld [vmem:[#allocation3 + $0x38] sm:$0xff]
      %v394 = vld [vmem:[#allocation3 + $0x40] sm:$0xff]
      %v395 = vld [vmem:[#allocation3 + $0x48] sm:$0xff]
      %v396 = vld [vmem:[#allocation3 + $0x50] sm:$0xff]
      %v397 = vld [vmem:[#allocation3 + $0x58] sm:$0xff]
      %v398 = vld [vmem:[#allocation3 + $0x60] sm:$0xff]
      %v399 = vld [vmem:[#allocation3 + $0x68] sm:$0xff]
      %v400 = vld [vmem:[#allocation3 + $0x70] sm:$0xff]
      %v401 = vld [vmem:[#allocation3 + $0x78] sm:$0xff]
      %vm402 = vcmp.gt.f32.partialorder %v386, 0.0
      %vm403 = vcmp.gt.f32.partialorder %v387, 0.0
      %vm404 = vcmp.gt.f32.partialorder %v388, 0.0
      %vm405 = vcmp.gt.f32.partialorder %v389, 0.0
      %vm406 = vcmp.gt.f32.partialorder %v390, 0.0
      %vm407 = vcmp.gt.f32.partialorder %v391, 0.0
      %vm408 = vcmp.gt.f32.partialorder %v392, 0.0
      %vm409 = vcmp.gt.f32.partialorder %v393, 0.0
      %vm410 = vcmp.gt.f32.partialorder %v394, 0.0
      %vm411 = vcmp.gt.f32.partialorder %v395, 0.0
      %vm412 = vcmp.gt.f32.partialorder %v396, 0.0
      %vm413 = vcmp.gt.f32.partialorder %v397, 0.0
      %vm414 = vcmp.gt.f32.partialorder %v398, 0.0
      %vm415 = vcmp.gt.f32.partialorder %v399, 0.0
      %vm416 = vcmp.gt.f32.partialorder %v400, 0.0
      %vm417 = vcmp.gt.f32.partialorder %v401, 0.0
      %v418 = vrcp.pop %v386
      %v419 = vmul.f32 %v386, %v418
      %v420 = vsub.f32 1.0, %v419
      %v421 = vmul.f32 %v418, %v420
      %v422 = vadd.f32 %v418, %v421
      %vm423 = vweird.f32 %v386
      %vm424 = vweird.f32 %v418
      %vm425 = vmor %vm423, %vm424
      %v426 = vsel %vm425, %v418, %v422
      %v427 = vand.u32 2147483647, %v386
      %vm428 = vcmp.eq.f32.partialorder %v427, 8.507059e+37
      %v429 = vand.u32 %v386, 2147483648
      %v430 = vor.u32 1.1754944e-38, %v429
      %v431 = vsel %vm428, %v430, %v426
      %v432 = vmul.f32 1.0, %v431
      %v433 = vrcp.pop %v387
      %v434 = vmul.f32 %v387, %v433
      %v435 = vsub.f32 1.0, %v434
      %v436 = vmul.f32 %v433, %v435
      %v437 = vadd.f32 %v433, %v436
      %vm438 = vweird.f32 %v387
      %vm439 = vweird.f32 %v433
      %vm440 = vmor %vm438, %vm439
      %v441 = vsel %vm440, %v433, %v437
      %v442 = vand.u32 2147483647, %v387
      %vm443 = vcmp.eq.f32.partialorder %v442, 8.507059e+37
      %v444 = vand.u32 %v387, 2147483648
      %v445 = vor.u32 1.1754944e-38, %v444
      %v446 = vsel %vm443, %v445, %v441
      %v447 = vmul.f32 1.0, %v446
      %v448 = vrcp.pop %v388
      %v449 = vmul.f32 %v388, %v448
      %v450 = vsub.f32 1.0, %v449
      %v451 = vmul.f32 %v448, %v450
      %v452 = vadd.f32 %v448, %v451
      %vm453 = vweird.f32 %v388
      %vm454 = vweird.f32 %v448
      %vm455 = vmor %vm453, %vm454
      %v456 = vsel %vm455, %v448, %v452
      %v457 = vand.u32 2147483647, %v388
      %vm458 = vcmp.eq.f32.partialorder %v457, 8.507059e+37
      %v459 = vand.u32 %v388, 2147483648
      %v460 = vor.u32 1.1754944e-38, %v459
      %v461 = vsel %vm458, %v460, %v456
      %v462 = vmul.f32 1.0, %v461
      %v463 = vrcp.pop %v389
      %v464 = vmul.f32 %v389, %v463
      %v465 = vsub.f32 1.0, %v464
      %v466 = vmul.f32 %v463, %v465
      %v467 = vadd.f32 %v463, %v466
      %vm468 = vweird.f32 %v389
      %vm469 = vweird.f32 %v463
      %vm470 = vmor %vm468, %vm469
      %v471 = vsel %vm470, %v463, %v467
      %v472 = vand.u32 2147483647, %v389
      %vm473 = vcmp.eq.f32.partialorder %v472, 8.507059e+37
      %v474 = vand.u32 %v389, 2147483648
      %v475 = vor.u32 1.1754944e-38, %v474
      %v476 = vsel %vm473, %v475, %v471
      %v477 = vmul.f32 1.0, %v476
      %v478 = vrcp.pop %v390
      %v479 = vmul.f32 %v390, %v478
      %v480 = vsub.f32 1.0, %v479
      %v481 = vmul.f32 %v478, %v480
      %v482 = vadd.f32 %v478, %v481
      %vm483 = vweird.f32 %v390
      %vm484 = vweird.f32 %v478
      %vm485 = vmor %vm483, %vm484
      %v486 = vsel %vm485, %v478, %v482
      %v487 = vand.u32 2147483647, %v390
      %vm488 = vcmp.eq.f32.partialorder %v487, 8.507059e+37
      %v489 = vand.u32 %v390, 2147483648
      %v490 = vor.u32 1.1754944e-38, %v489
      %v491 = vsel %vm488, %v490, %v486
      %v492 = vmul.f32 1.0, %v491
      %v493 = vrcp.pop %v391
      %v494 = vmul.f32 %v391, %v493
      %v495 = vsub.f32 1.0, %v494
      %v496 = vmul.f32 %v493, %v495
      %v497 = vadd.f32 %v493, %v496
      %vm498 = vweird.f32 %v391
      %vm499 = vweird.f32 %v493
      %vm500 = vmor %vm498, %vm499
      %v501 = vsel %vm500, %v493, %v497
      %v502 = vand.u32 2147483647, %v391
      %vm503 = vcmp.eq.f32.partialorder %v502, 8.507059e+37
      %v504 = vand.u32 %v391, 2147483648
      %v505 = vor.u32 1.1754944e-38, %v504
      %v506 = vsel %vm503, %v505, %v501
      %v507 = vmul.f32 1.0, %v506
      %v508 = vrcp.pop %v392
      %v509 = vmul.f32 %v392, %v508
      %v510 = vsub.f32 1.0, %v509
      %v511 = vmul.f32 %v508, %v510
      %v512 = vadd.f32 %v508, %v511
      %vm513 = vweird.f32 %v392
      %vm514 = vweird.f32 %v508
      %vm515 = vmor %vm513, %vm514
      %v516 = vsel %vm515, %v508, %v512
      %v517 = vand.u32 2147483647, %v392
      %vm518 = vcmp.eq.f32.partialorder %v517, 8.507059e+37
      %v519 = vand.u32 %v392, 2147483648
      %v520 = vor.u32 1.1754944e-38, %v519
      %v521 = vsel %vm518, %v520, %v516
      %v522 = vmul.f32 1.0, %v521
      %v523 = vrcp.pop %v393
      %v524 = vmul.f32 %v393, %v523
      %v525 = vsub.f32 1.0, %v524
      %v526 = vmul.f32 %v523, %v525
      %v527 = vadd.f32 %v523, %v526
      %vm528 = vweird.f32 %v393
      %vm529 = vweird.f32 %v523
      %vm530 = vmor %vm528, %vm529
      %v531 = vsel %vm530, %v523, %v527
      %v532 = vand.u32 2147483647, %v393
      %vm533 = vcmp.eq.f32.partialorder %v532, 8.507059e+37
      %v534 = vand.u32 %v393, 2147483648
      %v535 = vor.u32 1.1754944e-38, %v534
      %v536 = vsel %vm533, %v535, %v531
      %v537 = vmul.f32 1.0, %v536
      %v538 = vrcp.pop %v394
      %v539 = vmul.f32 %v394, %v538
      %v540 = vsub.f32 1.0, %v539
      %v541 = vmul.f32 %v538, %v540
      %v542 = vadd.f32 %v538, %v541
      %vm543 = vweird.f32 %v394
      %vm544 = vweird.f32 %v538
      %vm545 = vmor %vm543, %vm544
      %v546 = vsel %vm545, %v538, %v542
      %v547 = vand.u32 2147483647, %v394
      %vm548 = vcmp.eq.f32.partialorder %v547, 8.507059e+37
      %v549 = vand.u32 %v394, 2147483648
      %v550 = vor.u32 1.1754944e-38, %v549
      %v551 = vsel %vm548, %v550, %v546
      %v552 = vmul.f32 1.0, %v551
      %v553 = vrcp.pop %v395
      %v554 = vmul.f32 %v395, %v553
      %v555 = vsub.f32 1.0, %v554
      %v556 = vmul.f32 %v553, %v555
      %v557 = vadd.f32 %v553, %v556
      %vm558 = vweird.f32 %v395
      %vm559 = vweird.f32 %v553
      %vm560 = vmor %vm558, %vm559
      %v561 = vsel %vm560, %v553, %v557
      %v562 = vand.u32 2147483647, %v395
      %vm563 = vcmp.eq.f32.partialorder %v562, 8.507059e+37
      %v564 = vand.u32 %v395, 2147483648
      %v565 = vor.u32 1.1754944e-38, %v564
      %v566 = vsel %vm563, %v565, %v561
      %v567 = vmul.f32 1.0, %v566
      %v568 = vrcp.pop %v396
      %v569 = vmul.f32 %v396, %v568
      %v570 = vsub.f32 1.0, %v569
      %v571 = vmul.f32 %v568, %v570
      %v572 = vadd.f32 %v568, %v571
      %vm573 = vweird.f32 %v396
      %vm574 = vweird.f32 %v568
      %vm575 = vmor %vm573, %vm574
      %v576 = vsel %vm575, %v568, %v572
      %v577 = vand.u32 2147483647, %v396
      %vm578 = vcmp.eq.f32.partialorder %v577, 8.507059e+37
      %v579 = vand.u32 %v396, 2147483648
      %v580 = vor.u32 1.1754944e-38, %v579
      %v581 = vsel %vm578, %v580, %v576
      %v582 = vmul.f32 1.0, %v581
      %v583 = vrcp.pop %v397
      %v584 = vmul.f32 %v397, %v583
      %v585 = vsub.f32 1.0, %v584
      %v586 = vmul.f32 %v583, %v585
      %v587 = vadd.f32 %v583, %v586
      %vm588 = vweird.f32 %v397
      %vm589 = vweird.f32 %v583
      %vm590 = vmor %vm588, %vm589
      %v591 = vsel %vm590, %v583, %v587
      %v592 = vand.u32 2147483647, %v397
      %vm593 = vcmp.eq.f32.partialorder %v592, 8.507059e+37
      %v594 = vand.u32 %v397, 2147483648
      %v595 = vor.u32 1.1754944e-38, %v594
      %v596 = vsel %vm593, %v595, %v591
      %v597 = vmul.f32 1.0, %v596
      %v598 = vrcp.pop %v398
      %v599 = vmul.f32 %v398, %v598
      %v600 = vsub.f32 1.0, %v599
      %v601 = vmul.f32 %v598, %v600
      %v602 = vadd.f32 %v598, %v601
      %vm603 = vweird.f32 %v398
      %vm604 = vweird.f32 %v598
      %vm605 = vmor %vm603, %vm604
      %v606 = vsel %vm605, %v598, %v602
      %v607 = vand.u32 2147483647, %v398
      %vm608 = vcmp.eq.f32.partialorder %v607, 8.507059e+37
      %v609 = vand.u32 %v398, 2147483648
      %v610 = vor.u32 1.1754944e-38, %v609
      %v611 = vsel %vm608, %v610, %v606
      %v612 = vmul.f32 1.0, %v611
      %v613 = vrcp.pop %v399
      %v614 = vmul.f32 %v399, %v613
      %v615 = vsub.f32 1.0, %v614
      %v616 = vmul.f32 %v613, %v615
      %v617 = vadd.f32 %v613, %v616
      %vm618 = vweird.f32 %v399
      %vm619 = vweird.f32 %v613
      %vm620 = vmor %vm618, %vm619
      %v621 = vsel %vm620, %v613, %v617
      %v622 = vand.u32 2147483647, %v399
      %vm623 = vcmp.eq.f32.partialorder %v622, 8.507059e+37
      %v624 = vand.u32 %v399, 2147483648
      %v625 = vor.u32 1.1754944e-38, %v624
      %v626 = vsel %vm623, %v625, %v621
      %v627 = vmul.f32 1.0, %v626
      %v628 = vrcp.pop %v400
      %v629 = vmul.f32 %v400, %v628
      %v630 = vsub.f32 1.0, %v629
      %v631 = vmul.f32 %v628, %v630
      %v632 = vadd.f32 %v628, %v631
      %vm633 = vweird.f32 %v400
      %vm634 = vweird.f32 %v628
      %vm635 = vmor %vm633, %vm634
      %v636 = vsel %vm635, %v628, %v632
      %v637 = vand.u32 2147483647, %v400
      %vm638 = vcmp.eq.f32.partialorder %v637, 8.507059e+37
      %v639 = vand.u32 %v400, 2147483648
      %v640 = vor.u32 1.1754944e-38, %v639
      %v641 = vsel %vm638, %v640, %v636
      %v642 = vmul.f32 1.0, %v641
      %v643 = vrcp.pop %v401
      %v644 = vmul.f32 %v401, %v643
      %v645 = vsub.f32 1.0, %v644
      %v646 = vmul.f32 %v643, %v645
      %v647 = vadd.f32 %v643, %v646
      %vm648 = vweird.f32 %v401
      %vm649 = vweird.f32 %v643
      %vm650 = vmor %vm648, %vm649
      %v651 = vsel %vm650, %v643, %v647
      %v652 = vand.u32 2147483647, %v401
      %vm653 = vcmp.eq.f32.partialorder %v652, 8.507059e+37
      %v654 = vand.u32 %v401, 2147483648
      %v655 = vor.u32 1.1754944e-38, %v654
      %v656 = vsel %vm653, %v655, %v651
      %v657 = vmul.f32 1.0, %v656
      %v658 = vsel %vm402, %v432, 0.0
      %v659 = vsel %vm403, %v447, 0.0
      %v660 = vsel %vm404, %v462, 0.0
      %v661 = vsel %vm405, %v477, 0.0
      %v662 = vsel %vm406, %v492, 0.0
      %v663 = vsel %vm407, %v507, 0.0
      %v664 = vsel %vm408, %v522, 0.0
      %v665 = vsel %vm409, %v537, 0.0
      %v666 = vsel %vm410, %v552, 0.0
      %v667 = vsel %vm411, %v567, 0.0
      %v668 = vsel %vm412, %v582, 0.0
      %v669 = vsel %vm413, %v597, 0.0
      %v670 = vsel %vm414, %v612, 0.0
      %v671 = vsel %vm415, %v627, 0.0
      %v672 = vsel %vm416, %v642, 0.0
      %v673 = vsel %vm417, %v657, 0.0
      %v674 = vld [vmem:[#allocation2] sm:$0xff]
      %v675 = vld [vmem:[#allocation2 + $0x8] sm:$0xff]
      %v676 = vld [vmem:[#allocation2 + $0x10] sm:$0xff]
      %v677 = vld [vmem:[#allocation2 + $0x18] sm:$0xff]
      %v678 = vld [vmem:[#allocation2 + $0x20] sm:$0xff]
      %v679 = vld [vmem:[#allocation2 + $0x28] sm:$0xff]
      %v680 = vld [vmem:[#allocation2 + $0x30] sm:$0xff]
      %v681 = vld [vmem:[#allocation2 + $0x38] sm:$0xff]
      %v682 = vld [vmem:[#allocation2 + $0x40] sm:$0xff]
      %v683 = vld [vmem:[#allocation2 + $0x48] sm:$0xff]
      %v684 = vld [vmem:[#allocation2 + $0x50] sm:$0xff]
      %v685 = vld [vmem:[#allocation2 + $0x58] sm:$0xff]
      %v686 = vld [vmem:[#allocation2 + $0x60] sm:$0xff]
      %v687 = vld [vmem:[#allocation2 + $0x68] sm:$0xff]
      %v688 = vld [vmem:[#allocation2 + $0x70] sm:$0xff]
      %v689 = vld [vmem:[#allocation2 + $0x78] sm:$0xff]
      %691 = vset.pattern.permute.xlu0 0
      %692 = vperm.xlu0 %691, %v658
      %v693 = vpop.permute.xlu0 %692
      %696 = vset.pattern.permute.xlu0 0
      %697 = vperm.xlu0 %696, %v659
      %v698 = vpop.permute.xlu0 %697
      %701 = vset.pattern.permute.xlu0 0
      %702 = vperm.xlu0 %701, %v660
      %v703 = vpop.permute.xlu0 %702
      %706 = vset.pattern.permute.xlu0 0
      %707 = vperm.xlu0 %706, %v661
      %v708 = vpop.permute.xlu0 %707
      %711 = vset.pattern.permute.xlu0 0
      %712 = vperm.xlu0 %711, %v662
      %v713 = vpop.permute.xlu0 %712
      %716 = vset.pattern.permute.xlu0 0
      %717 = vperm.xlu0 %716, %v663
      %v718 = vpop.permute.xlu0 %717
      %721 = vset.pattern.permute.xlu0 0
      %722 = vperm.xlu0 %721, %v664
      %v723 = vpop.permute.xlu0 %722
      %726 = vset.pattern.permute.xlu0 0
      %727 = vperm.xlu0 %726, %v665
      %v728 = vpop.permute.xlu0 %727
      %731 = vset.pattern.permute.xlu0 0
      %732 = vperm.xlu0 %731, %v666
      %v733 = vpop.permute.xlu0 %732
      %736 = vset.pattern.permute.xlu0 0
      %737 = vperm.xlu0 %736, %v667
      %v738 = vpop.permute.xlu0 %737
      %741 = vset.pattern.permute.xlu0 0
      %742 = vperm.xlu0 %741, %v668
      %v743 = vpop.permute.xlu0 %742
      %746 = vset.pattern.permute.xlu0 0
      %747 = vperm.xlu0 %746, %v669
      %v748 = vpop.permute.xlu0 %747
      %751 = vset.pattern.permute.xlu0 0
      %752 = vperm.xlu0 %751, %v670
      %v753 = vpop.permute.xlu0 %752
      %756 = vset.pattern.permute.xlu0 0
      %757 = vperm.xlu0 %756, %v671
      %v758 = vpop.permute.xlu0 %757
      %761 = vset.pattern.permute.xlu0 0
      %762 = vperm.xlu0 %761, %v672
      %v763 = vpop.permute.xlu0 %762
      %766 = vset.pattern.permute.xlu0 0
      %767 = vperm.xlu0 %766, %v673
      %v768 = vpop.permute.xlu0 %767
      %v770 = vmul.f32 %v674, %v693
      %v771 = vmul.f32 %v675, %v698
      %v772 = vmul.f32 %v676, %v703
      %v773 = vmul.f32 %v677, %v708
      %v774 = vmul.f32 %v678, %v713
      %v775 = vmul.f32 %v679, %v718
      %v776 = vmul.f32 %v680, %v723
      %v777 = vmul.f32 %v681, %v728
      %v778 = vmul.f32 %v682, %v733
      %v779 = vmul.f32 %v683, %v738
      %v780 = vmul.f32 %v684, %v743
      %v781 = vmul.f32 %v685, %v748
      %v782 = vmul.f32 %v686, %v753
      %v783 = vmul.f32 %v687, %v758
      %v784 = vmul.f32 %v688, %v763
      %v785 = vmul.f32 %v689, %v768
      %786 = vst [vmem:[#allocation4] sm:$0xff] %v770
      %787 = vst [vmem:[#allocation4 + $0x8] sm:$0xff] %v771
      %788 = vst [vmem:[#allocation4 + $0x10] sm:$0xff] %v772
      %789 = vst [vmem:[#allocation4 + $0x18] sm:$0xff] %v773
      %790 = vst [vmem:[#allocation4 + $0x20] sm:$0xff] %v774
      %791 = vst [vmem:[#allocation4 + $0x28] sm:$0xff] %v775
      %792 = vst [vmem:[#allocation4 + $0x30] sm:$0xff] %v776
      %793 = vst [vmem:[#allocation4 + $0x38] sm:$0xff] %v777
      %794 = vst [vmem:[#allocation4 + $0x40] sm:$0xff] %v778
      %795 = vst [vmem:[#allocation4 + $0x48] sm:$0xff] %v779
      %796 = vst [vmem:[#allocation4 + $0x50] sm:$0xff] %v780
      %797 = vst [vmem:[#allocation4 + $0x58] sm:$0xff] %v781
      %798 = vst [vmem:[#allocation4 + $0x60] sm:$0xff] %v782
      %799 = vst [vmem:[#allocation4 + $0x68] sm:$0xff] %v783
      %800 = vst [vmem:[#allocation4 + $0x70] sm:$0xff] %v784
      %801 = vst [vmem:[#allocation4 + $0x78] sm:$0xff] %v785
    $region25: #{tpu_custom_call.1} parent=1 // pred_fallthru
      _
    // Predicated region
    $region26: #{tpu_custom_call.1} parent=1 // pred_check
      _
    $region27: #{tpu_custom_call.1} parent=1 // pred_check_branch
      %803 = sbr.rel (0) target = $region29
    $region28: #{tpu_custom_call.1} parent=1 // pred_region
      %805 = vsyncadd [#allocation5], 0
      %s806 = sshll.u32 [#allocation4], 4
      %s807 = int_to_ptr.vmem [resolvable:$true] %s806
      %s808 = sshll.u32 %s4, 4
      %s809 = int_to_ptr.hbm [resolvable:$true] %s808
      %814 = dma.vmem_to_hbm [thread:$0]  %s807, 2048, %s809, [#allocation5], 128, 128, 8
    $region29: #{tpu_custom_call.1} parent=1 // pred_fallthru
      _
    // Predicated region
    $region30: #{tpu_custom_call.1} parent=1 // pred_check
      _
    $region31: #{tpu_custom_call.1} parent=1 // pred_check_branch
      %816 = sbr.rel (0) target = $region33
    $region32: #{tpu_custom_call.1} parent=1 // pred_region
      %818 = dma.done [#allocation5], 2048
    $region33: #{tpu_custom_call.1} parent=1 // pred_fallthru
      _
    %819 = vsyncpa [#allocation5], 1

</llo_original>
